<compile_context>
chip_gen: v7x
topology: tpu7x:2x2x1
jax: 0.10.0
libtpu: 0.0.40
codegen_flags: <defaults>
</compile_context>

<pallas_src>
import numpy as np
import jax
import jax.numpy as jnp
from jax import lax
from jax.experimental import pallas as pl
from jax.experimental.pallas import tpu as pltpu

QKD = 7            # question_knowledge_dim
HKD = 3            # header_knowledge_dim
NEG = -10000000000.0
LANE = 128
SUBLANE = 8


def _round_up(x, m):
    return ((x + m - 1) // m) * m


# ----------------------------------------------------------------------------
# Plain-JAX glue: 2-layer bidirectional LSTM (PyTorch gate order i,f,g,o),
# length-masked to emulate pack_padded_sequence / pad_packed_sequence.
# ----------------------------------------------------------------------------
def _lstm_dir(x, lengths, Wi, Wh, bi, bh, reverse):
    B, T, _ = x.shape
    H = Wh.shape[1]
    ts = jnp.arange(T)
    if reverse:
        ts = ts[::-1]

    def step(carry, t):
        h, c = carry
        xt = lax.dynamic_index_in_dim(x, t, axis=1, keepdims=False)  # [B, D]
        valid = (t < lengths)[:, None]
        gates = xt @ Wi.T + h @ Wh.T + bi + bh
        i, f, g, o = jnp.split(gates, 4, axis=-1)
        i = jax.nn.sigmoid(i)
        f = jax.nn.sigmoid(f)
        g = jnp.tanh(g)
        o = jax.nn.sigmoid(o)
        c_new = f * c + i * g
        h_new = o * jnp.tanh(c_new)
        h = jnp.where(valid, h_new, h)
        c = jnp.where(valid, c_new, c)
        out = jnp.where(valid, h_new, 0.0)   # pad_packed zeros past length
        return (h, c), out

    init = (jnp.zeros((B, H), x.dtype), jnp.zeros((B, H), x.dtype))
    _, outs = lax.scan(step, init, ts)       # [T, B, H] in scan order
    if reverse:
        outs = outs[::-1]
    return jnp.transpose(outs, (1, 0, 2))    # [B, T, H]


def _run_bilstm(x, lengths, layers):
    h = x
    for (fwd, bwd) in layers:
        out_f = _lstm_dir(h, lengths, *fwd, reverse=False)
        out_b = _lstm_dir(h, lengths, *bwd, reverse=True)
        h = jnp.concatenate([out_f, out_b], axis=-1)
    return h                                  # [B, T, hS]


# ----------------------------------------------------------------------------
# Pallas kernel: attention + output head, one batch *block* per grid step.
# ----------------------------------------------------------------------------
def _wcp_kernel(wn_ref, whs_ref, bias_n_ref, bias_h_ref, wstk_ref, vstk_ref,
                score_ref):
    wn = wn_ref[...]                                  # [B, mLn, D]
    whs = whs_ref[...]                                # [B, mLh, D]
    B, mLn, D = wn.shape
    _, mLh, _ = whs.shape
    cdt = wn.dtype                                    # MXU operand dtype

    wattT = wstk_ref[0]                               # [D, D]  W_att.weight^T
    wcT = wstk_ref[1]                                 # [D, D]  W_c.weight^T
    whsT = wstk_ref[2]                                # [D, D]  W_hs.weight^T
    watt_b = vstk_ref[0:1, :]                         # [1, D]
    wc_b = vstk_ref[1:2, :]
    whs_b = vstk_ref[2:3, :]
    wout_c = vstk_ref[3:4, :]                         # W_out.weight[:, :hS]
    wout_h = vstk_ref[4:5, :]                         # W_out.weight[:, hS:]

    # Position-wise linears as single 2-D MXU matmuls over the flattened batch
    # block.  D is a lane multiple and mLn/mLh are sublane multiples, so these
    # reshapes are layout-trivial (no VMEM relayout copy).
    att_n = (jnp.dot(wn.reshape(B * mLn, D), wattT,
                     preferred_element_type=jnp.float32)
             + watt_b).reshape(B, mLn, D)
    yh = (jnp.dot(whs.reshape(B * mLh, D), whsT,
                  preferred_element_type=jnp.float32)
          + whs_b).reshape(B, mLh, D)

    # att[b,h,n] = <wenc_hs[b,h,:], W_att(wenc_n)[b,n,:]>  (batched bmm)
    att = jnp.einsum('bhd,bnd->bhn', whs, att_n.astype(cdt),
                     preferred_element_type=jnp.float32)   # [B, mLh, mLn]

    # Additive length mask (0 / -1e10) + softmax over the question dim.
    # All softmax / transcendental math stays f32 (VPU/EUP path).
    att = att + bias_n_ref[...][:, None, :]
    m = jnp.max(att, axis=-1, keepdims=True)
    e = jnp.exp(att - m)
    p = e / jnp.sum(e, axis=-1, keepdims=True)   # exact divide: only (B,mLh,1)

    # context c_n = sum_n p * wenc_n, then W_c
    c_n = jnp.einsum('bhn,bnd->bhd', p.astype(cdt), wn,
                     preferred_element_type=jnp.float32)   # [B, mLh, D]
    yc = (jnp.dot(c_n.reshape(B * mLh, D).astype(cdt), wcT,
                  preferred_element_type=jnp.float32)
          + wc_b).reshape(B, mLh, D)

    # W_out(tanh(cat[yc, yh])) == sum(tanh(yc)*w[:hS]) + sum(tanh(yh)*w[hS:]) + b
    # (weight split in the wrapper, bias folded into bias_h; padded lanes
    # contribute exactly 0 since bias pad 0 -> tanh(0) * 0).
    s = (jnp.sum(jnp.tanh(yc) * wout_c[None, :, :], axis=-1)
         + jnp.sum(jnp.tanh(yh) * wout_h[None, :, :], axis=-1))   # [B, mLh]

    # Zero-pad to the lane-dense output width, then add the additive header
    # mask (wout_b at valid positions, -1e10 past l_hs -> length penalty).
    Hpad = score_ref.shape[-1]
    if Hpad > mLh:
        s = jnp.concatenate(
            [s, jnp.zeros((B, Hpad - mLh), jnp.float32)], axis=-1)
    score_ref[...] = s + bias_h_ref[...]


def wcp_attention_head(wenc_n_aug, wenc_hs_aug, l_n, l_hs, params,
                       mxu_dtype=jnp.float32):
    bS, mL_n, Dn = wenc_n_aug.shape
    _, mL_hs, Dh = wenc_hs_aug.shape
    hS = params['wc_w'].shape[0]

    # Grid sizing: one step with the whole batch on the (serial) single-TC
    # grid; for large batches exactly two blocks (one per v7x TensorCore).
    if bS <= 8:
        n_blk, B_BLK = 1, bS
    else:
        n_blk = 2
        B_BLK = _round_up(-(-bS // 2), SUBLANE)
    bS_p = n_blk * B_BLK

    # Pad every contraction / lane dim to a common 128 multiple and the
    # sequence dims to sublane multiples.  VMEM per step stays in the
    # tens-of-KiB to few-MiB range, far below 64 MiB (v7x) / 128 MiB budgets.
    DPAD = _round_up(max(Dn, Dh, hS), LANE)
    mLn_p = _round_up(mL_n, SUBLANE)
    mLh_p = _round_up(mL_hs, SUBLANE)
    H_pad = _round_up(mLh_p, LANE)

    l_n_arr = jnp.asarray(l_n, jnp.int32)
    l_hs_arr = jnp.asarray(l_hs, jnp.int32)
    l_n_p = jnp.pad(l_n_arr, (0, bS_p - bS))
    l_hs_p = jnp.pad(l_hs_arr, (0, bS_p - bS))

    # Additive masks (replace in-kernel compare+select).  W_out's scalar bias
    # is folded into the valid lanes of the header bias.
    bias_n = jnp.where(jnp.arange(mLn_p)[None, :] < l_n_p[:, None],
                       0.0, NEG).astype(jnp.float32)            # [bS_p, mLn_p]
    bias_h = jnp.where(jnp.arange(H_pad)[None, :] < l_hs_p[:, None],
                       params['wout_b'][0], NEG).astype(jnp.float32)

    wn = jnp.pad(wenc_n_aug,
                 ((0, bS_p - bS), (0, mLn_p - mL_n), (0, DPAD - Dn))
                 ).astype(mxu_dtype)
    whs = jnp.pad(wenc_hs_aug,
                  ((0, bS_p - bS), (0, mLh_p - mL_hs), (0, DPAD - Dh))
                  ).astype(mxu_dtype)

    def pad2(w):
        return jnp.pad(w, ((0, DPAD - w.shape[0]), (0, DPAD - w.shape[1])))

    def pad1(v):
        return jnp.pad(v, (0, DPAD - v.shape[0]))

    # Pre-transposed, zero-padded weight matrices stacked into one operand
    # (one DMA stream instead of three); all small vectors packed into a
    # single (8, DPAD) tile (one stream instead of five).
    wstack = jnp.stack([pad2(params['watt_w'].T),
                        pad2(params['wc_w'].T),
                        pad2(params['whs_w'].T)], axis=0).astype(mxu_dtype)
    zeros = jnp.zeros((DPAD,), jnp.float32)
    vstack = jnp.stack([pad1(params['watt_b']),
                        pad1(params['wc_b']),
                        pad1(params['whs_b']),
                        pad1(params['wout_w'][0, :hS]),
                        pad1(params['wout_w'][0, hS:]),
                        zeros, zeros, zeros], axis=0).astype(jnp.float32)

    grid_spec = pltpu.PrefetchScalarGridSpec(
        num_scalar_prefetch=0,
        grid=(n_blk,),
        in_specs=[
            pl.BlockSpec((B_BLK, mLn_p, DPAD), lambda b: (b, 0, 0)),
            pl.BlockSpec((B_BLK, mLh_p, DPAD), lambda b: (b, 0, 0)),
            pl.BlockSpec((B_BLK, mLn_p), lambda b: (b, 0)),
            pl.BlockSpec((B_BLK, H_pad), lambda b: (b, 0)),
            pl.BlockSpec((3, DPAD, DPAD), lambda b: (0, 0, 0)),
            pl.BlockSpec((8, DPAD), lambda b: (0, 0)),
        ],
        out_specs=pl.BlockSpec((B_BLK, H_pad), lambda b: (b, 0)),
    )

    out = pl.pallas_call(
        _wcp_kernel,
        out_shape=jax.ShapeDtypeStruct((bS_p, H_pad), jnp.float32),
        grid_spec=grid_spec,
        compiler_params=pltpu.CompilerParams(
            dimension_semantics=("parallel",)),
    )(wn, whs, bias_n, bias_h, wstack, vstack)
    return out[:bS, :mL_hs]                               # [bS, mL_hs]


# ----------------------------------------------------------------------------
# Full WCP.forward equivalent.
# ----------------------------------------------------------------------------
def wcp_forward(params, wemb_n, l_n, wemb_hpu, l_hpu, l_hs,
                knowledge, knowledge_header, mxu_dtype=jnp.float32):
    mL_n = max(l_n)
    bS = len(l_hs)
    mL_hs = max(l_hs)
    hS = params['wc_w'].shape[0]
    l_n_arr = jnp.asarray(l_n, jnp.int32)
    l_hpu_arr = jnp.asarray(l_hpu, jnp.int32)
    l_hs_arr = jnp.asarray(l_hs, jnp.int32)

    # question encoder (encode)
    wenc_n = _run_bilstm(wemb_n, l_n_arr, params['enc_n'])            # [bS, mL_n, hS]
    kn = np.zeros((bS, mL_n), np.int32)
    for b, k in enumerate(knowledge):
        kn[b, :len(k)] = np.asarray(k, np.int32)
    feature = jax.nn.one_hot(jnp.asarray(kn), QKD, dtype=jnp.float32)  # scatter_ one-hot
    wenc_n = jnp.concatenate([wenc_n, feature], axis=-1)               # [bS, mL_n, hS+7]

    # header encoder (encode_hpu): last valid timestep per header unit, repack
    out_h = _run_bilstm(wemb_hpu, l_hpu_arr, params['enc_h'])          # [total, mL_hpu, hS]
    last = out_h[jnp.arange(out_h.shape[0]), l_hpu_arr - 1, :]         # [total, hS]
    rows, st = [], 0
    for l1 in l_hs:
        pad = jnp.zeros((mL_hs - l1, hS), jnp.float32)
        rows.append(jnp.concatenate([last[st:st + l1], pad], axis=0))
        st += l1
    wenc_hs = jnp.stack(rows, axis=0)                                  # [bS, mL_hs, hS]
    kh = np.zeros((bS, mL_hs), np.int32)
    for b, k in enumerate(knowledge_header):
        kh[b, :len(k)] = np.asarray(k, np.int32)
    feature2 = jax.nn.one_hot(jnp.asarray(kh), HKD, dtype=jnp.float32)
    wenc_hs = jnp.concatenate([wenc_hs, feature2], axis=-1)            # [bS, mL_hs, hS+3]

    score = wcp_attention_head(wenc_n, wenc_hs, l_n_arr, l_hs_arr, params,
                               mxu_dtype=mxu_dtype)
    return score, wenc_n, wenc_hs


# Pure-JAX reference for the Pallas-covered part (validation only).
def _ref_attention(wenc_n, wenc_hs, l_n, l_hs, params):
    att_n = wenc_n @ params['watt_w'].T + params['watt_b']
    att = jnp.einsum('bhd,bnd->bhn', wenc_hs, att_n)
    mL_n = wenc_n.shape[1]
    mask_n = jnp.arange(mL_n)[None, None, :] < jnp.asarray(l_n)[:, None, None]
    att = jnp.where(mask_n, att, NEG)
    p = jax.nn.softmax(att, axis=2)
    c_n = jnp.einsum('bhn,bnd->bhd', p, wenc_n)
    y = jnp.concatenate([c_n @ params['wc_w'].T + params['wc_b'],
                         wenc_hs @ params['whs_w'].T + params['whs_b']], axis=-1)
    score = (jnp.tanh(y) @ params['wout_w'].T)[..., 0] + params['wout_b'][0]
    mL_hs = wenc_hs.shape[1]
    mask_h = jnp.arange(mL_hs)[None, :] < jnp.asarray(l_hs)[:, None]
    return jnp.where(mask_h, score, NEG)


# ----------------------------------------------------------------------------
# Deterministic parameter init (shapes from WCP.__init__, eval mode).
# ----------------------------------------------------------------------------
def init_params(key, iS, hS, lS=2):
    H = hS // 2
    keys = iter(jax.random.split(key, 64))

    def uni(shape):
        return jax.random.uniform(next(keys), shape, jnp.float32, -0.1, 0.1)

    def lstm_dir_params(in_dim):
        return (uni((4 * H, in_dim)), uni((4 * H, H)), uni((4 * H,)), uni((4 * H,)))

    def bilstm(in_dim):
        layers, d = [], in_dim
        for _ in range(lS):
            layers.append((lstm_dir_params(d), lstm_dir_params(d)))
            d = 2 * H
        return layers

    p = {}
    p['enc_n'] = bilstm(iS)
    p['enc_h'] = bilstm(iS)
    p['watt_w'] = uni((hS + HKD, hS + QKD)); p['watt_b'] = uni((hS + HKD,))
    p['wc_w'] = uni((hS, hS + QKD));         p['wc_b'] = uni((hS,))
    p['whs_w'] = uni((hS, hS + HKD));        p['whs_b'] = uni((hS,))
    p['wout_w'] = uni((1, 2 * hS));          p['wout_b'] = uni((1,))
    return p


if __name__ == "__main__":
    iS, hS = 16, 32
    bS = 2
    l_n = [8, 6]; mL_n = max(l_n)
    l_hs = [3, 2]; mL_hs = max(l_hs)
    l_hpu = [3, 4, 2, 4, 3]                  # sum(l_hs) header units
    mL_hpu = max(l_hpu)

    key = jax.random.PRNGKey(0)
    kp, k1, k2 = jax.random.split(key, 3)
    params = init_params(kp, iS, hS)

    wemb_n = jax.random.normal(k1, (bS, mL_n, iS), jnp.float32)
    wemb_hpu = jax.random.normal(k2, (sum(l_hs), mL_hpu, iS), jnp.float32)
    knowledge = [[0, 1, 2, 3, 4, 5, 6, 1], [2, 0, 1, 3, 4, 5]]   # in [0, 7)
    knowledge_header = [[0, 1, 2], [1, 2]]                       # in [0, 3)

    # mxu_dtype=jnp.float32 for the tight reference check; use jnp.bfloat16 on
    # v6e/v7x at production shapes (iS=300, hS=100).
    score, wenc_n_aug, wenc_hs_aug = wcp_forward(
        params, wemb_n, l_n, wemb_hpu, l_hpu, l_hs, knowledge, knowledge_header,
        mxu_dtype=jnp.float32)
    score = jax.block_until_ready(score)

    ref = _ref_attention(wenc_n_aug, wenc_hs_aug, l_n, l_hs, params)
    assert score.shape == (bS, mL_hs)
    # Both the kernel and the reference run matmuls at the backend's default
    # MXU precision; the tolerance covers a possible single-pass vs multi-pass
    # f32 default mismatch between XLA and Mosaic (structural errors would be
    # orders of magnitude larger).
    np.testing.assert_allclose(np.asarray(score), np.asarray(ref),
                               rtol=2e-2, atol=2e-2)
    print("KERNEL_OK")
</pallas_src>

<mosaic_0001>
module attributes {stable_mosaic.version = 11 : i64} {
  func.func @_wcp_kernel(%arg0: i32, %arg1: memref<2x8x128xf32, #tpu.memory_space<vmem>>, %arg2: memref<2x8x128xf32, #tpu.memory_space<vmem>>, %arg3: memref<2x8xf32, #tpu.memory_space<vmem>>, %arg4: memref<2x128xf32, #tpu.memory_space<vmem>>, %arg5: memref<3x128x128xf32, #tpu.memory_space<vmem>>, %arg6: memref<8x128xf32, #tpu.memory_space<vmem>>, %arg7: memref<2x128xf32, #tpu.memory_space<vmem>>) attributes {dimension_semantics = [#tpu.dimension_semantics<parallel>], iteration_bounds = array<i64: 1>, scalar_prefetch = 0 : i64, scratch_operands = 0 : i64, tpu.core_type = #tpu.core_type<tc>, window_params = [{transform_indices = @transform_0, window_bounds = array<i64: 2, 8, 128>}, {transform_indices = @transform_1, window_bounds = array<i64: 2, 8, 128>}, {transform_indices = @transform_2, window_bounds = array<i64: 2, 8>}, {transform_indices = @transform_3, window_bounds = array<i64: 2, 128>}, {pipeline_mode = #tpu.pipeline_mode<synchronous>, transform_indices = @transform_4, window_bounds = array<i64: 3, 128, 128>}, {pipeline_mode = #tpu.pipeline_mode<synchronous>, transform_indices = @transform_5, window_bounds = array<i64: 8, 128>}, {transform_indices = @transform_6, window_bounds = array<i64: 2, 128>}]} {
    %c0 = arith.constant 0 : index
    %c0_0 = arith.constant 0 : index
    %c0_1 = arith.constant 0 : index
    %0 = vector.load %arg1[%c0, %c0_0, %c0_1] : memref<2x8x128xf32, #tpu.memory_space<vmem>>, vector<2x8x128xf32>
    %c0_2 = arith.constant 0 : index
    %c0_3 = arith.constant 0 : index
    %c0_4 = arith.constant 0 : index
    %1 = vector.load %arg2[%c0_2, %c0_3, %c0_4] : memref<2x8x128xf32, #tpu.memory_space<vmem>>, vector<2x8x128xf32>
    %c0_5 = arith.constant 0 : index
    %c0_6 = arith.constant 0 : index
    %c0_7 = arith.constant 0 : index
    %2 = vector.load %arg5[%c0_5, %c0_6, %c0_7] : memref<3x128x128xf32, #tpu.memory_space<vmem>>, vector<1x128x128xf32>
    %3 = vector.shape_cast %2 : vector<1x128x128xf32> to vector<128x128xf32>
    %c1 = arith.constant 1 : index
    %c0_8 = arith.constant 0 : index
    %c0_9 = arith.constant 0 : index
    %4 = vector.load %arg5[%c1, %c0_8, %c0_9] : memref<3x128x128xf32, #tpu.memory_space<vmem>>, vector<1x128x128xf32>
    %5 = vector.shape_cast %4 : vector<1x128x128xf32> to vector<128x128xf32>
    %c2 = arith.constant 2 : index
    %c0_10 = arith.constant 0 : index
    %c0_11 = arith.constant 0 : index
    %6 = vector.load %arg5[%c2, %c0_10, %c0_11] : memref<3x128x128xf32, #tpu.memory_space<vmem>>, vector<1x128x128xf32>
    %7 = vector.shape_cast %6 : vector<1x128x128xf32> to vector<128x128xf32>
    %c0_12 = arith.constant 0 : index
    %c0_13 = arith.constant 0 : index
    %8 = vector.load %arg6[%c0_12, %c0_13] : memref<8x128xf32, #tpu.memory_space<vmem>>, vector<1x128xf32>
    %c1_14 = arith.constant 1 : index
    %c0_15 = arith.constant 0 : index
    %9 = vector.load %arg6[%c1_14, %c0_15] : memref<8x128xf32, #tpu.memory_space<vmem>>, vector<1x128xf32>
    %c2_16 = arith.constant 2 : index
    %c0_17 = arith.constant 0 : index
    %10 = vector.load %arg6[%c2_16, %c0_17] : memref<8x128xf32, #tpu.memory_space<vmem>>, vector<1x128xf32>
    %c3 = arith.constant 3 : index
    %c0_18 = arith.constant 0 : index
    %11 = vector.load %arg6[%c3, %c0_18] : memref<8x128xf32, #tpu.memory_space<vmem>>, vector<1x128xf32>
    %c4 = arith.constant 4 : index
    %c0_19 = arith.constant 0 : index
    %12 = vector.load %arg6[%c4, %c0_19] : memref<8x128xf32, #tpu.memory_space<vmem>>, vector<1x128xf32>
    %13 = vector.shape_cast %0 : vector<2x8x128xf32> to vector<16x128xf32>
    %cst = arith.constant dense<0.000000e+00> : vector<16x128xf32>
    %14 = tpu.matmul %13, %3, %cst {dimension_numbers = #tpu.dot_dimension_numbers<[1], [0], [0], [1], [0, 0, 1, 1], [], []>} : vector<16x128xf32>, vector<128x128xf32>, vector<16x128xf32> -> vector<16x128xf32>
    %15 = vector.broadcast %8 : vector<1x128xf32> to vector<16x128xf32>
    %16 = arith.addf %14, %15 : vector<16x128xf32>
    %17 = vector.shape_cast %16 : vector<16x128xf32> to vector<2x8x128xf32>
    %18 = vector.shape_cast %1 : vector<2x8x128xf32> to vector<16x128xf32>
    %cst_20 = arith.constant dense<0.000000e+00> : vector<16x128xf32>
    %19 = tpu.matmul %18, %7, %cst_20 {dimension_numbers = #tpu.dot_dimension_numbers<[1], [0], [0], [1], [0, 0, 1, 1], [], []>} : vector<16x128xf32>, vector<128x128xf32>, vector<16x128xf32> -> vector<16x128xf32>
    %20 = vector.broadcast %10 : vector<1x128xf32> to vector<16x128xf32>
    %21 = arith.addf %19, %20 : vector<16x128xf32>
    %22 = vector.shape_cast %21 : vector<16x128xf32> to vector<2x8x128xf32>
    "tpu.trace_start"() <{level = 10 : i32, message = "bhd,bnd->bhn"}> : () -> ()
    %cst_21 = arith.constant dense<0.000000e+00> : vector<2x8x8xf32>
    %23 = tpu.matmul %1, %17, %cst_21 {dimension_numbers = #tpu.dot_dimension_numbers<[2], [2], [1], [1], [0, 0, 0, 1, 1, 1], [0], [0]>} : vector<2x8x128xf32>, vector<2x8x128xf32>, vector<2x8x8xf32> -> vector<2x8x8xf32>
    "tpu.trace_stop"() : () -> ()
    %c0_22 = arith.constant 0 : index
    %c0_23 = arith.constant 0 : index
    %24 = vector.load %arg3[%c0_22, %c0_23] : memref<2x8xf32, #tpu.memory_space<vmem>>, vector<2x8xf32>
    %25 = vector.shape_cast %24 : vector<2x8xf32> to vector<2x1x8xf32>
    %26 = vector.broadcast %25 : vector<2x1x8xf32> to vector<2x8x8xf32>
    %27 = arith.addf %23, %26 : vector<2x8x8xf32>
    %cst_24 = arith.constant dense<0xFF800000> : vector<2x8xf32>
    %28 = vector.multi_reduction <maximumf>, %27, %cst_24 [2] : vector<2x8x8xf32> to vector<2x8xf32>
    %29 = vector.shape_cast %28 : vector<2x8xf32> to vector<2x8x1xf32>
    %30 = vector.broadcast %29 : vector<2x8x1xf32> to vector<2x8x8xf32>
    %31 = arith.subf %27, %30 : vector<2x8x8xf32>
    %32 = math.exp %31 : vector<2x8x8xf32>
    %cst_25 = arith.constant dense<0.000000e+00> : vector<2x8xf32>
    %33 = vector.multi_reduction <add>, %32, %cst_25 [2] : vector<2x8x8xf32> to vector<2x8xf32>
    %34 = vector.shape_cast %33 : vector<2x8xf32> to vector<2x8x1xf32>
    %35 = vector.broadcast %34 : vector<2x8x1xf32> to vector<2x8x8xf32>
    %36 = arith.divf %32, %35 : vector<2x8x8xf32>
    "tpu.trace_start"() <{level = 10 : i32, message = "bhn,bnd->bhd"}> : () -> ()
    %cst_26 = arith.constant dense<0.000000e+00> : vector<2x8x128xf32>
    %37 = tpu.matmul %36, %0, %cst_26 {dimension_numbers = #tpu.dot_dimension_numbers<[2], [1], [1], [2], [0, 0, 0, 1, 1, 2], [0], [0]>} : vector<2x8x8xf32>, vector<2x8x128xf32>, vector<2x8x128xf32> -> vector<2x8x128xf32>
    "tpu.trace_stop"() : () -> ()
    %38 = vector.shape_cast %37 : vector<2x8x128xf32> to vector<16x128xf32>
    %cst_27 = arith.constant dense<0.000000e+00> : vector<16x128xf32>
    %39 = tpu.matmul %38, %5, %cst_27 {dimension_numbers = #tpu.dot_dimension_numbers<[1], [0], [0], [1], [0, 0, 1, 1], [], []>} : vector<16x128xf32>, vector<128x128xf32>, vector<16x128xf32> -> vector<16x128xf32>
    %40 = vector.broadcast %9 : vector<1x128xf32> to vector<16x128xf32>
    %41 = arith.addf %39, %40 : vector<16x128xf32>
    %42 = vector.shape_cast %41 : vector<16x128xf32> to vector<2x8x128xf32>
    %43 = math.tanh %42 : vector<2x8x128xf32>
    %44 = vector.shape_cast %11 : vector<1x128xf32> to vector<1x1x128xf32>
    %45 = vector.broadcast %44 : vector<1x1x128xf32> to vector<2x8x128xf32>
    %46 = arith.mulf %43, %45 : vector<2x8x128xf32>
    %cst_28 = arith.constant dense<0.000000e+00> : vector<2x8xf32>
    %47 = vector.multi_reduction <add>, %46, %cst_28 [2] : vector<2x8x128xf32> to vector<2x8xf32>
    %48 = math.tanh %22 : vector<2x8x128xf32>
    %49 = vector.shape_cast %12 : vector<1x128xf32> to vector<1x1x128xf32>
    %50 = vector.broadcast %49 : vector<1x1x128xf32> to vector<2x8x128xf32>
    %51 = arith.mulf %48, %50 : vector<2x8x128xf32>
    %cst_29 = arith.constant dense<0.000000e+00> : vector<2x8xf32>
    %52 = vector.multi_reduction <add>, %51, %cst_29 [2] : vector<2x8x128xf32> to vector<2x8xf32>
    %53 = arith.addf %47, %52 : vector<2x8xf32>
    %cst_30 = arith.constant 0.000000e+00 : f32
    %54 = vector.broadcast %cst_30 : f32 to vector<2x120xf32>
    %55 = tpu.concatenate %53, %54 in 1 : vector<2x8xf32>, vector<2x120xf32> -> vector<2x128xf32>
    %c0_31 = arith.constant 0 : index
    %c0_32 = arith.constant 0 : index
    %56 = vector.load %arg4[%c0_31, %c0_32] : memref<2x128xf32, #tpu.memory_space<vmem>>, vector<2x128xf32>
    %57 = arith.addf %55, %56 : vector<2x128xf32>
    %c0_33 = arith.constant 0 : index
    %c0_34 = arith.constant 0 : index
    %58 = vector.load %arg7[%c0_33, %c0_34] : memref<2x128xf32, #tpu.memory_space<vmem>>, vector<2x128xf32>
    tpu.vector_store %arg7[%c0_33, %c0_34], %57 {strides = array<i32>} : memref<2x128xf32, #tpu.memory_space<vmem>>, vector<2x128xf32>,
    return
  }
  func.func @transform_0(%arg0: i32) -> (i32, i32, i32) {
    %c0_i32 = arith.constant 0 : i32
    %c0_i32_0 = arith.constant 0 : i32
    %c0_i32_1 = arith.constant 0 : i32
    return %arg0, %c0_i32, %c0_i32_0 : i32, i32, i32
  }
  func.func @transform_1(%arg0: i32) -> (i32, i32, i32) {
    %c0_i32 = arith.constant 0 : i32
    %c0_i32_0 = arith.constant 0 : i32
    %c0_i32_1 = arith.constant 0 : i32
    return %arg0, %c0_i32, %c0_i32_0 : i32, i32, i32
  }
  func.func @transform_2(%arg0: i32) -> (i32, i32) {
    %c0_i32 = arith.constant 0 : i32
    %c0_i32_0 = arith.constant 0 : i32
    return %arg0, %c0_i32 : i32, i32
  }
  func.func @transform_3(%arg0: i32) -> (i32, i32) {
    %c0_i32 = arith.constant 0 : i32
    %c0_i32_0 = arith.constant 0 : i32
    return %arg0, %c0_i32 : i32, i32
  }
  func.func @transform_4(%arg0: i32) -> (i32, i32, i32) {
    %c0_i32 = arith.constant 0 : i32
    %c0_i32_0 = arith.constant 0 : i32
    %c0_i32_1 = arith.constant 0 : i32
    %c0_i32_2 = arith.constant 0 : i32
    return %c0_i32, %c0_i32_0, %c0_i32_1 : i32, i32, i32
  }
  func.func @transform_5(%arg0: i32) -> (i32, i32) {
    %c0_i32 = arith.constant 0 : i32
    %c0_i32_0 = arith.constant 0 : i32
    %c0_i32_1 = arith.constant 0 : i32
    return %c0_i32, %c0_i32_0 : i32, i32
  }
  func.func @transform_6(%arg0: i32) -> (i32, i32) {
    %c0_i32 = arith.constant 0 : i32
    %c0_i32_0 = arith.constant 0 : i32
    return %arg0, %c0_i32 : i32, i32
  }
}

</mosaic_0001>

<llo_original>
// kernel: tpu_custom_call.1
$region0: #{tpu_custom_call.1}
  #allocation0 [shape = 'u32[]', space=smem, size = 0x4, offset = 0x4, fixed_abs, tag = 'smem constant byte address 0x4 - core index']
  #allocation1 [shape = 'u32[144,128]{1,0:T(1,128)}', space=vmem, size = 0x12000, scoped, tag = 'internal scratch']
  %s0 = inlined_call_operand.hbm [shape: f32[2,8,128], index: 0, kind: input, shape index: {}]
  %s1 = inlined_call_operand.hbm [shape: f32[2,8,128], index: 1, kind: input, shape index: {}]
  %s2 = inlined_call_operand.vmem [shape: f32[2,8], index: 2, kind: input, shape index: {}]
  %s3 = inlined_call_operand.vmem [shape: f32[2,128], index: 3, kind: input, shape index: {}]
  %s4 = inlined_call_operand.hbm [shape: f32[3,128,128], index: 4, kind: input, shape index: {}]
  %s5 = inlined_call_operand.vmem [shape: f32[8,128], index: 5, kind: input, shape index: {}]
  %s6 = inlined_call_operand.hbm [shape: f32[2,128], index: 6, kind: output, shape index: {}]
  %s7 = sld [smem:[#allocation0]]
  $region46: #{tpu_custom_call.1} parent=0
    _
  %s9 = ssub.s32 1, %s7
  %s10 = scalar_select 0, %s9, %s7
  $region1: #{tpu_custom_call.1} parent=0
    #allocation2 [shape = 'u8[8192]{0}', space=vmem, size = 0x2000, scoped, tag = 'input window, operand 0, single buffered']
    #allocation3 [shape = 's32[1]{0}', space=sflag, size = 0x4, scoped, tag = 'scoped memory for tpu_custom_call.1']
    #allocation4 [shape = 's32[1]{0}', space=sflag, size = 0x4, scoped, tag = 'scoped memory for tpu_custom_call.1']
    #allocation5 [shape = 'u8[8192]{0}', space=vmem, size = 0x2000, scoped, tag = 'input window, operand 1, single buffered']
    #allocation6 [shape = 's32[1]{0}', space=sflag, size = 0x4, scoped, tag = 'scoped memory for tpu_custom_call.1']
    #allocation7 [shape = 'u8[196608]{0}', space=vmem, size = 0x30000, scoped, tag = 'input window, operand 4, single buffered']
    #allocation8 [shape = 'u8[1024]{0}', space=vmem, size = 0x400, scoped, tag = 'output window, operand 0, single buffered']
    %11 = vsyncpa [#allocation3], 0
    %12 = vsyncpa [#allocation6], 0
    %13 = vsyncpa [#allocation4], 0
    // Predicated region
    $region2: #{tpu_custom_call.1} parent=1 // pred_check
      _
    $region3: #{tpu_custom_call.1} parent=1 // pred_check_branch
      %15 = sbr.rel (0) target = $region5
    $region4: #{tpu_custom_call.1} parent=1 // pred_region
      %s17 = ssub.s32 256, 256
      %18 = vsyncadd [#allocation3], %s17
      %s19 = sshll.u32 [#allocation2], 4
      %s20 = int_to_ptr.vmem [resolvable:$true] %s19
      %25 = dma.hbm_to_vmem [thread:$0]  %s0, 256, %s20, [#allocation3], 128, 128, 8
    $region5: #{tpu_custom_call.1} parent=1 // pred_fallthru
      _
    // Predicated region
    $region6: #{tpu_custom_call.1} parent=1 // pred_check
      _
    $region7: #{tpu_custom_call.1} parent=1 // pred_check_branch
      %27 = sbr.rel (0) target = $region9
    $region8: #{tpu_custom_call.1} parent=1 // pred_region
      %s29 = ssub.s32 256, 256
      %30 = vsyncadd [#allocation6], %s29
      %s31 = sshll.u32 [#allocation5], 4
      %s32 = int_to_ptr.vmem [resolvable:$true] %s31
      %37 = dma.hbm_to_vmem [thread:$0]  %s1, 256, %s32, [#allocation6], 128, 128, 8
    $region9: #{tpu_custom_call.1} parent=1 // pred_fallthru
      _
    // Predicated region
    $region10: #{tpu_custom_call.1} parent=1 // pred_check
      _
    $region11: #{tpu_custom_call.1} parent=1 // pred_check_branch
      %39 = sbr.rel (0) target = $region13
    $region12: #{tpu_custom_call.1} parent=1 // pred_region
      _
    $region13: #{tpu_custom_call.1} parent=1 // pred_fallthru
      _
    // Predicated region
    $region14: #{tpu_custom_call.1} parent=1 // pred_check
      _
    $region15: #{tpu_custom_call.1} parent=1 // pred_check_branch
      %41 = sbr.rel (0) target = $region17
    $region16: #{tpu_custom_call.1} parent=1 // pred_region
      _
    $region17: #{tpu_custom_call.1} parent=1 // pred_fallthru
      _
    // Predicated region
    $region18: #{tpu_custom_call.1} parent=1 // pred_check
      _
    $region19: #{tpu_custom_call.1} parent=1 // pred_check_branch
      %43 = sbr.rel (0) target = $region21
    $region20: #{tpu_custom_call.1} parent=1 // pred_region
      %s45 = ssub.s32 6144, 6144
      %46 = vsyncadd [#allocation6], %s45
      %s47 = sshll.u32 [#allocation7], 4
      %s48 = int_to_ptr.vmem [resolvable:$true] %s47
      %53 = dma.hbm_to_vmem [thread:$0]  %s4, 6144, %s48, [#allocation6], 128, 128, 8
    $region21: #{tpu_custom_call.1} parent=1 // pred_fallthru
      _
    // Predicated region
    $region22: #{tpu_custom_call.1} parent=1 // pred_check
      _
    $region23: #{tpu_custom_call.1} parent=1 // pred_check_branch
      %55 = sbr.rel (0) target = $region25
    $region24: #{tpu_custom_call.1} parent=1 // pred_region
      _
    $region25: #{tpu_custom_call.1} parent=1 // pred_fallthru
      _
    // Predicated region
    $region26: #{tpu_custom_call.1} parent=1 // pred_check
      _
    $region27: #{tpu_custom_call.1} parent=1 // pred_check_branch
      %57 = sbr.rel (0) target = $region29
    $region28: #{tpu_custom_call.1} parent=1 // pred_region
      %58 = dma.done [#allocation3], 256
    $region29: #{tpu_custom_call.1} parent=1 // pred_fallthru
      _
    // Predicated region
    $region30: #{tpu_custom_call.1} parent=1 // pred_check
      _
    $region31: #{tpu_custom_call.1} parent=1 // pred_check_branch
      %60 = sbr.rel (0) target = $region33
    $region32: #{tpu_custom_call.1} parent=1 // pred_region
      %61 = dma.done [#allocation6], 256
    $region33: #{tpu_custom_call.1} parent=1 // pred_fallthru
      _
    // Predicated region
    $region34: #{tpu_custom_call.1} parent=1 // pred_check
      _
    $region35: #{tpu_custom_call.1} parent=1 // pred_check_branch
      %63 = sbr.rel (0) target = $region37
    $region36: #{tpu_custom_call.1} parent=1 // pred_region
      %64 = dma.done [#allocation6], 6144
    $region37: #{tpu_custom_call.1} parent=1 // pred_fallthru
      _
    %v65 = vld [vmem:[#allocation2] sm:$0xff]
    %v66 = vld [vmem:[#allocation2 + $0x8] sm:$0xff]
    %v67 = vld [vmem:[#allocation5] sm:$0xff]
    %v68 = vld [vmem:[#allocation5 + $0x8] sm:$0xff]
    %v69 = vld [vmem:[#allocation7] sm:$0xff]
    %v70 = vld [vmem:[#allocation7 + $0x8] sm:$0xff]
    %v71 = vld [vmem:[#allocation7 + $0x10] sm:$0xff]
    %v72 = vld [vmem:[#allocation7 + $0x18] sm:$0xff]
    %v73 = vld [vmem:[#allocation7 + $0x20] sm:$0xff]
    %v74 = vld [vmem:[#allocation7 + $0x28] sm:$0xff]
    %v75 = vld [vmem:[#allocation7 + $0x30] sm:$0xff]
    %v76 = vld [vmem:[#allocation7 + $0x38] sm:$0xff]
    %v77 = vld [vmem:[#allocation7 + $0x40] sm:$0xff]
    %v78 = vld [vmem:[#allocation7 + $0x48] sm:$0xff]
    %v79 = vld [vmem:[#allocation7 + $0x50] sm:$0xff]
    %v80 = vld [vmem:[#allocation7 + $0x58] sm:$0xff]
    %v81 = vld [vmem:[#allocation7 + $0x60] sm:$0xff]
    %v82 = vld [vmem:[#allocation7 + $0x68] sm:$0xff]
    %v83 = vld [vmem:[#allocation7 + $0x70] sm:$0xff]
    %v84 = vld [vmem:[#allocation7 + $0x78] sm:$0xff]
    %s85 = scalar_lea.vmem [#allocation7], 128
    %v86 = vld [vmem:[%s85] sm:$0xff]
    %v87 = vld [vmem:[%s85 + $0x8] sm:$0xff]
    %v88 = vld [vmem:[%s85 + $0x10] sm:$0xff]
    %v89 = vld [vmem:[%s85 + $0x18] sm:$0xff]
    %v90 = vld [vmem:[%s85 + $0x20] sm:$0xff]
    %v91 = vld [vmem:[%s85 + $0x28] sm:$0xff]
    %v92 = vld [vmem:[%s85 + $0x30] sm:$0xff]
    %v93 = vld [vmem:[%s85 + $0x38] sm:$0xff]
    %v94 = vld [vmem:[%s85 + $0x40] sm:$0xff]
    %v95 = vld [vmem:[%s85 + $0x48] sm:$0xff]
    %v96 = vld [vmem:[%s85 + $0x50] sm:$0xff]
    %v97 = vld [vmem:[%s85 + $0x58] sm:$0xff]
    %v98 = vld [vmem:[%s85 + $0x60] sm:$0xff]
    %v99 = vld [vmem:[%s85 + $0x68] sm:$0xff]
    %v100 = vld [vmem:[%s85 + $0x70] sm:$0xff]
    %v101 = vld [vmem:[%s85 + $0x78] sm:$0xff]
    %s102 = scalar_lea.vmem [#allocation7], 256
    %v103 = vld [vmem:[%s102] sm:$0xff]
    %v104 = vld [vmem:[%s102 + $0x8] sm:$0xff]
    %v105 = vld [vmem:[%s102 + $0x10] sm:$0xff]
    %v106 = vld [vmem:[%s102 + $0x18] sm:$0xff]
    %v107 = vld [vmem:[%s102 + $0x20] sm:$0xff]
    %v108 = vld [vmem:[%s102 + $0x28] sm:$0xff]
    %v109 = vld [vmem:[%s102 + $0x30] sm:$0xff]
    %v110 = vld [vmem:[%s102 + $0x38] sm:$0xff]
    %v111 = vld [vmem:[%s102 + $0x40] sm:$0xff]
    %v112 = vld [vmem:[%s102 + $0x48] sm:$0xff]
    %v113 = vld [vmem:[%s102 + $0x50] sm:$0xff]
    %v114 = vld [vmem:[%s102 + $0x58] sm:$0xff]
    %v115 = vld [vmem:[%s102 + $0x60] sm:$0xff]
    %v116 = vld [vmem:[%s102 + $0x68] sm:$0xff]
    %v117 = vld [vmem:[%s102 + $0x70] sm:$0xff]
    %v118 = vld [vmem:[%s102 + $0x78] sm:$0xff]
    %v119 = vld [vmem:[%s5] sm:$0x1]
    %v120 = vld [vmem:[%s5 + $0x1] sm:$0x1]
    %v121 = vld [vmem:[%s5 + $0x2] sm:$0x1]
    %v122 = vld [vmem:[%s5 + $0x3] sm:$0x1]
    %v123 = vld [vmem:[%s5 + $0x4] sm:$0x1]
    %v124 = vlaneseq
    %v125 = vshrl.u32 %v124, 7
    %v126 = vsub.s32 0, %v125
    %v127 = vrot.slane %v119, %v126
    %128 = vmatprep.subr.mxu0 0.0
    %129 = vmatpush1.msra.mxu0 %v69
    %130 = vmatprep.subr.mxu0 0.0
    %131 = vmatpush1.msra.mxu0 %v70
    %132 = vmatprep.subr.mxu0 0.0
    %133 = vmatpush1.msra.mxu0 %v71
    %134 = vmatprep.subr.mxu0 0.0
    %135 = vmatpush1.msra.mxu0 %v72
    %136 = vmatprep.subr.mxu0 0.0
    %137 = vmatpush1.msra.mxu0 %v73
    %138 = vmatprep.subr.mxu0 0.0
    %139 = vmatpush1.msra.mxu0 %v74
    %140 = vmatprep.subr.mxu0 0.0
    %141 = vmatpush1.msra.mxu0 %v75
    %142 = vmatprep.subr.mxu0 0.0
    %143 = vmatpush1.msra.mxu0 %v76
    %144 = vmatprep.subr.mxu0 0.0
    %145 = vmatpush1.msra.mxu0 %v77
    %146 = vmatprep.subr.mxu0 0.0
    %147 = vmatpush1.msra.mxu0 %v78
    %148 = vmatprep.subr.mxu0 0.0
    %149 = vmatpush1.msra.mxu0 %v79
    %150 = vmatprep.subr.mxu0 0.0
    %151 = vmatpush1.msra.mxu0 %v80
    %152 = vmatprep.subr.mxu0 0.0
    %153 = vmatpush1.msra.mxu0 %v81
    %154 = vmatprep.subr.mxu0 0.0
    %155 = vmatpush1.msra.mxu0 %v82
    %156 = vmatprep.subr.mxu0 0.0
    %157 = vmatpush1.msra.mxu0 %v83
    %158 = vmatprep.subr.mxu0 0.0
    %159 = vmatpush1.msra.mxu0 %v84
    %160 = vmatprep.subr.mxu0 0.0
    %161 = vmatpush1.msra.mxu0 0.0
    %162 = vmatprep.subr.mxu0 0.0
    %163 = vmatpush1.msra.mxu0 0.0
    %164 = vmatprep.subr.mxu0 0.0
    %165 = vmatpush1.msra.mxu0 0.0
    %166 = vmatprep.subr.mxu0 0.0
    %167 = vmatpush1.msra.mxu0 0.0
    %168 = vmatprep.subr.mxu0 0.0
    %169 = vmatpush1.msra.mxu0 0.0
    %170 = vmatprep.subr.mxu0 0.0
    %171 = vmatpush1.msra.mxu0 0.0
    %172 = vmatprep.subr.mxu0 0.0
    %173 = vmatpush1.msra.mxu0 0.0
    %174 = vmatprep.subr.mxu0 0.0
    %175 = vmatpush1.msra.mxu0 0.0
    %176 = vmatprep.subr.mxu0 0.0
    %177 = vmatpush1.msra.mxu0 0.0
    %178 = vmatprep.subr.mxu0 0.0
    %179 = vmatpush1.msra.mxu0 0.0
    %180 = vmatprep.subr.mxu0 0.0
    %181 = vmatpush1.msra.mxu0 0.0
    %182 = vmatprep.subr.mxu0 0.0
    %183 = vmatpush1.msra.mxu0 0.0
    %184 = vmatprep.subr.mxu0 0.0
    %185 = vmatpush1.msra.mxu0 0.0
    %186 = vmatprep.subr.mxu0 0.0
    %187 = vmatpush1.msra.mxu0 0.0
    %188 = vmatprep.subr.mxu0 0.0
    %189 = vmatpush1.msra.mxu0 0.0
    %190 = vmatprep.subr.mxu0 0.0
    %191 = vmatpush1.msra.mxu0 0.0
    %192 = vmatprep.mubr.f32.mxu0 0.0
    %193 = vmatmul.mubr.f32.gmra.mrb[0].mxu0 %v65
    %v194 = vpop.f32.mrb[0].mxu0
    %v195 = vadd.f32 %v127, %v194
    %v196 = vpop.f32.mrb[0].mxu0
    %197 = vmatprep.mubr.f32.mxu0 0.0
    %198 = vmatmul.mubr.f32.gmra.mrb[0].mxu0 %v66
    %v199 = vpop.f32.mrb[0].mxu0
    %v200 = vadd.f32 %v127, %v199
    %v201 = vpop.f32.mrb[0].mxu0
    %202 = vdwg.mxu0
    %v203 = vlaneseq
    %v204 = vshrl.u32 %v203, 7
    %v205 = vsub.s32 0, %v204
    %v206 = vrot.slane %v121, %v205
    %207 = vmatprep.subr.mxu0 0.0
    %208 = vmatpush1.msra.mxu0 %v103
    %209 = vmatprep.subr.mxu0 0.0
    %210 = vmatpush1.msra.mxu0 %v104
    %211 = vmatprep.subr.mxu0 0.0
    %212 = vmatpush1.msra.mxu0 %v105
    %213 = vmatprep.subr.mxu0 0.0
    %214 = vmatpush1.msra.mxu0 %v106
    %215 = vmatprep.subr.mxu0 0.0
    %216 = vmatpush1.msra.mxu0 %v107
    %217 = vmatprep.subr.mxu0 0.0
    %218 = vmatpush1.msra.mxu0 %v108
    %219 = vmatprep.subr.mxu0 0.0
    %220 = vmatpush1.msra.mxu0 %v109
    %221 = vmatprep.subr.mxu0 0.0
    %222 = vmatpush1.msra.mxu0 %v110
    %223 = vmatprep.subr.mxu0 0.0
    %224 = vmatpush1.msra.mxu0 %v111
    %225 = vmatprep.subr.mxu0 0.0
    %226 = vmatpush1.msra.mxu0 %v112
    %227 = vmatprep.subr.mxu0 0.0
    %228 = vmatpush1.msra.mxu0 %v113
    %229 = vmatprep.subr.mxu0 0.0
    %230 = vmatpush1.msra.mxu0 %v114
    %231 = vmatprep.subr.mxu0 0.0
    %232 = vmatpush1.msra.mxu0 %v115
    %233 = vmatprep.subr.mxu0 0.0
    %234 = vmatpush1.msra.mxu0 %v116
    %235 = vmatprep.subr.mxu0 0.0
    %236 = vmatpush1.msra.mxu0 %v117
    %237 = vmatprep.subr.mxu0 0.0
    %238 = vmatpush1.msra.mxu0 %v118
    %239 = vmatprep.subr.mxu0 0.0
    %240 = vmatpush1.msra.mxu0 0.0
    %241 = vmatprep.subr.mxu0 0.0
    %242 = vmatpush1.msra.mxu0 0.0
    %243 = vmatprep.subr.mxu0 0.0
    %244 = vmatpush1.msra.mxu0 0.0
    %245 = vmatprep.subr.mxu0 0.0
    %246 = vmatpush1.msra.mxu0 0.0
    %247 = vmatprep.subr.mxu0 0.0
    %248 = vmatpush1.msra.mxu0 0.0
    %249 = vmatprep.subr.mxu0 0.0
    %250 = vmatpush1.msra.mxu0 0.0
    %251 = vmatprep.subr.mxu0 0.0
    %252 = vmatpush1.msra.mxu0 0.0
    %253 = vmatprep.subr.mxu0 0.0
    %254 = vmatpush1.msra.mxu0 0.0
    %255 = vmatprep.subr.mxu0 0.0
    %256 = vmatpush1.msra.mxu0 0.0
    %257 = vmatprep.subr.mxu0 0.0
    %258 = vmatpush1.msra.mxu0 0.0
    %259 = vmatprep.subr.mxu0 0.0
    %260 = vmatpush1.msra.mxu0 0.0
    %261 = vmatprep.subr.mxu0 0.0
    %262 = vmatpush1.msra.mxu0 0.0
    %263 = vmatprep.subr.mxu0 0.0
    %264 = vmatpush1.msra.mxu0 0.0
    %265 = vmatprep.subr.mxu0 0.0
    %266 = vmatpush1.msra.mxu0 0.0
    %267 = vmatprep.subr.mxu0 0.0
    %268 = vmatpush1.msra.mxu0 0.0
    %269 = vmatprep.subr.mxu0 0.0
    %270 = vmatpush1.msra.mxu0 0.0
    %271 = vmatprep.mubr.f32.mxu0 0.0
    %272 = vmatmul.mubr.f32.gmra.mrb[0].mxu0 %v67
    %v273 = vpop.f32.mrb[0].mxu0
    %v274 = vadd.f32 %v206, %v273
    %v275 = vpop.f32.mrb[0].mxu0
    %276 = vmatprep.mubr.f32.mxu0 0.0
    %277 = vmatmul.mubr.f32.gmra.mrb[0].mxu0 %v68
    %v278 = vpop.f32.mrb[0].mxu0
    %v279 = vadd.f32 %v206, %v278
    %v280 = vpop.f32.mrb[0].mxu0
    %281 = vdwg.mxu0
    %v282 = vld [vmem:[%s2] sm:$0x3]
    %v285 = vunpack.c.l.s4 1966171168
    %v286 = vunpack.c.0.s8 %v285
    %v287 = vlaneseq
    %v288 = vshrl.u32 %v287, 7
    %v289 = vsub.s32 %v286, %v288
    %v290 = vrot.slane %v282, %v289
    %v291 = vcombine.high %v290, %v290
    %v293 = vunpack.c.l.s4 1966171168
    %v294 = vunpack.c.0.s8 %v293
    %v295 = vlaneseq
    %v296 = vshrl.u32 %v295, 7
    %v297 = vsub.s32 %v294, %v296
    %v298 = vrot.slane %v290, %v297
    %v300 = vunpack.c.l.s4 1966171168
    %v301 = vunpack.c.0.s8 %v300
    %v302 = vlaneseq
    %v303 = vshrl.u32 %v302, 7
    %v304 = vsub.s32 %v301, %v303
    %v305 = vrot.slane %v291, %v304
    %v306 = vlaneseq
    %v307 = vshrl.u32 %v306, 7
    %v308 = vsub.s32 0, %v307
    %v309 = vrot.slane %v298, %v308
    %v310 = vlaneseq
    %v311 = vshrl.u32 %v310, 7
    %v312 = vsub.s32 0, %v311
    %v313 = vrot.slane %v305, %v312
    %316 = vmatprep.subr.mxu0 0.0
    %317 = vmatpush1.xpose.msra.mxu0 %v195
    %318 = vmatprep.subr.mxu0 0.0
    %319 = vmatpush1.xpose.msra.mxu0 0.0
    %320 = vmatprep.subr.mxu0 0.0
    %321 = vmatpush1.xpose.msra.mxu0 0.0
    %322 = vmatprep.subr.mxu0 0.0
    %323 = vmatpush1.xpose.msra.mxu0 0.0
    %324 = vmatprep.subr.mxu0 0.0
    %325 = vmatpush1.xpose.msra.mxu0 0.0
    %326 = vmatprep.subr.mxu0 0.0
    %327 = vmatpush1.xpose.msra.mxu0 0.0
    %328 = vmatprep.subr.mxu0 0.0
    %329 = vmatpush1.xpose.msra.mxu0 0.0
    %330 = vmatprep.subr.mxu0 0.0
    %331 = vmatpush1.xpose.msra.mxu0 0.0
    %332 = vmatprep.subr.mxu0 0.0
    %333 = vmatpush1.xpose.msra.mxu0 0.0
    %334 = vmatprep.subr.mxu0 0.0
    %335 = vmatpush1.xpose.msra.mxu0 0.0
    %336 = vmatprep.subr.mxu0 0.0
    %337 = vmatpush1.xpose.msra.mxu0 0.0
    %338 = vmatprep.subr.mxu0 0.0
    %339 = vmatpush1.xpose.msra.mxu0 0.0
    %340 = vmatprep.subr.mxu0 0.0
    %341 = vmatpush1.xpose.msra.mxu0 0.0
    %342 = vmatprep.subr.mxu0 0.0
    %343 = vmatpush1.xpose.msra.mxu0 0.0
    %344 = vmatprep.subr.mxu0 0.0
    %345 = vmatpush1.xpose.msra.mxu0 0.0
    %346 = vmatprep.subr.mxu0 0.0
    %347 = vmatpush1.xpose.msra.mxu0 0.0
    %348 = vmatprep.subr.mxu0 0.0
    %349 = vmatpush1.xpose.msra.mxu0 0.0
    %350 = vmatprep.subr.mxu0 0.0
    %351 = vmatpush1.xpose.msra.mxu0 0.0
    %352 = vmatprep.subr.mxu0 0.0
    %353 = vmatpush1.xpose.msra.mxu0 0.0
    %354 = vmatprep.subr.mxu0 0.0
    %355 = vmatpush1.xpose.msra.mxu0 0.0
    %356 = vmatprep.subr.mxu0 0.0
    %357 = vmatpush1.xpose.msra.mxu0 0.0
    %358 = vmatprep.subr.mxu0 0.0
    %359 = vmatpush1.xpose.msra.mxu0 0.0
    %360 = vmatprep.subr.mxu0 0.0
    %361 = vmatpush1.xpose.msra.mxu0 0.0
    %362 = vmatprep.subr.mxu0 0.0
    %363 = vmatpush1.xpose.msra.mxu0 0.0
    %364 = vmatprep.subr.mxu0 0.0
    %365 = vmatpush1.xpose.msra.mxu0 0.0
    %366 = vmatprep.subr.mxu0 0.0
    %367 = vmatpush1.xpose.msra.mxu0 0.0
    %368 = vmatprep.subr.mxu0 0.0
    %369 = vmatpush1.xpose.msra.mxu0 0.0
    %370 = vmatprep.subr.mxu0 0.0
    %371 = vmatpush1.xpose.msra.mxu0 0.0
    %372 = vmatprep.subr.mxu0 0.0
    %373 = vmatpush1.xpose.msra.mxu0 0.0
    %374 = vmatprep.subr.mxu0 0.0
    %375 = vmatpush1.xpose.msra.mxu0 0.0
    %376 = vmatprep.subr.mxu0 0.0
    %377 = vmatpush1.xpose.msra.mxu0 0.0
    %378 = vmatprep.subr.mxu0 0.0
    %379 = vmatpush1.xpose.msra.mxu0 0.0
    %380 = vmatprep.mubr.f32.mxu0 0.0
    %381 = vmatmul.mubr.f32.gmra.mrb[0].mxu0 %v67
    %v382 = vpop.f32.mrb[0].mxu0
    %v383 = vadd.f32 %v309, %v382
    %v384 = vpop.f32.mrb[0].mxu0
    %385 = vdwg.mxu0
    %386 = vmatprep.subr.mxu0 0.0
    %387 = vmatpush1.xpose.msra.mxu0 %v200
    %388 = vmatprep.subr.mxu0 0.0
    %389 = vmatpush1.xpose.msra.mxu0 0.0
    %390 = vmatprep.subr.mxu0 0.0
    %391 = vmatpush1.xpose.msra.mxu0 0.0
    %392 = vmatprep.subr.mxu0 0.0
    %393 = vmatpush1.xpose.msra.mxu0 0.0
    %394 = vmatprep.subr.mxu0 0.0
    %395 = vmatpush1.xpose.msra.mxu0 0.0
    %396 = vmatprep.subr.mxu0 0.0
    %397 = vmatpush1.xpose.msra.mxu0 0.0
    %398 = vmatprep.subr.mxu0 0.0
    %399 = vmatpush1.xpose.msra.mxu0 0.0
    %400 = vmatprep.subr.mxu0 0.0
    %401 = vmatpush1.xpose.msra.mxu0 0.0
    %402 = vmatprep.subr.mxu0 0.0
    %403 = vmatpush1.xpose.msra.mxu0 0.0
    %404 = vmatprep.subr.mxu0 0.0
    %405 = vmatpush1.xpose.msra.mxu0 0.0
    %406 = vmatprep.subr.mxu0 0.0
    %407 = vmatpush1.xpose.msra.mxu0 0.0
    %408 = vmatprep.subr.mxu0 0.0
    %409 = vmatpush1.xpose.msra.mxu0 0.0
    %410 = vmatprep.subr.mxu0 0.0
    %411 = vmatpush1.xpose.msra.mxu0 0.0
    %412 = vmatprep.subr.mxu0 0.0
    %413 = vmatpush1.xpose.msra.mxu0 0.0
    %414 = vmatprep.subr.mxu0 0.0
    %415 = vmatpush1.xpose.msra.mxu0 0.0
    %416 = vmatprep.subr.mxu0 0.0
    %417 = vmatpush1.xpose.msra.mxu0 0.0
    %418 = vmatprep.subr.mxu0 0.0
    %419 = vmatpush1.xpose.msra.mxu0 0.0
    %420 = vmatprep.subr.mxu0 0.0
    %421 = vmatpush1.xpose.msra.mxu0 0.0
    %422 = vmatprep.subr.mxu0 0.0
    %423 = vmatpush1.xpose.msra.mxu0 0.0
    %424 = vmatprep.subr.mxu0 0.0
    %425 = vmatpush1.xpose.msra.mxu0 0.0
    %426 = vmatprep.subr.mxu0 0.0
    %427 = vmatpush1.xpose.msra.mxu0 0.0
    %428 = vmatprep.subr.mxu0 0.0
    %429 = vmatpush1.xpose.msra.mxu0 0.0
    %430 = vmatprep.subr.mxu0 0.0
    %431 = vmatpush1.xpose.msra.mxu0 0.0
    %432 = vmatprep.subr.mxu0 0.0
    %433 = vmatpush1.xpose.msra.mxu0 0.0
    %434 = vmatprep.subr.mxu0 0.0
    %435 = vmatpush1.xpose.msra.mxu0 0.0
    %436 = vmatprep.subr.mxu0 0.0
    %437 = vmatpush1.xpose.msra.mxu0 0.0
    %438 = vmatprep.subr.mxu0 0.0
    %439 = vmatpush1.xpose.msra.mxu0 0.0
    %440 = vmatprep.subr.mxu0 0.0
    %441 = vmatpush1.xpose.msra.mxu0 0.0
    %442 = vmatprep.subr.mxu0 0.0
    %443 = vmatpush1.xpose.msra.mxu0 0.0
    %444 = vmatprep.subr.mxu0 0.0
    %445 = vmatpush1.xpose.msra.mxu0 0.0
    %446 = vmatprep.subr.mxu0 0.0
    %447 = vmatpush1.xpose.msra.mxu0 0.0
    %448 = vmatprep.subr.mxu0 0.0
    %449 = vmatpush1.xpose.msra.mxu0 0.0
    %450 = vmatprep.mubr.f32.mxu0 0.0
    %451 = vmatmul.mubr.f32.gmra.mrb[0].mxu0 %v68
    %v452 = vpop.f32.mrb[0].mxu0
    %v453 = vadd.f32 %v313, %v452
    %v454 = vpop.f32.mrb[0].mxu0
    %455 = vdwg.mxu0
    %vm456 = vcmask 64512
    %v457 = vsel %vm456, %v383, -inf
    %458 = vmax.xlane.f32.xlu0 %v457
    %v459 = vpop.xlane.xlu0 %458
    %v460 = vsel %vm456, %v453, -inf
    %461 = vmax.xlane.f32.xlu0 %v460
    %v462 = vpop.xlane.xlu0 %461
    %v463 = vsub.f32 %v383, %v459
    %v464 = vsub.f32 %v453, %v462
    %v465 = vmul.f32 %v463, 1.442695
    %v466 = vpow.pop %v465
    %v467 = vmul.f32 %v464, 1.442695
    %v468 = vpow.pop %v467
    %v469 = vsel %vm456, %v466, 0.0
    %470 = vadd.xlane.f32.xlu0 %v469
    %v471 = vpop.xlane.xlu0 %470
    %v472 = vsel %vm456, %v468, 0.0
    %473 = vadd.xlane.f32.xlu0 %v472
    %v474 = vpop.xlane.xlu0 %473
    %v475 = vrcp.pop %v471
    %v476 = vmul.f32 %v466, %v475
    %v477 = vrcp.pop %v474
    %v478 = vmul.f32 %v468, %v477
    %v480 = vsel %vm456, %v476, 0
    %482 = vmatprep.subr.mxu0 0.0
    %483 = vmatpush1.msra.mxu0 %v65
    %484 = vmatprep.subr.mxu0 0.0
    %485 = vmatpush1.msra.mxu0 0.0
    %486 = vmatprep.subr.mxu0 0.0
    %487 = vmatpush1.msra.mxu0 0.0
    %488 = vmatprep.subr.mxu0 0.0
    %489 = vmatpush1.msra.mxu0 0.0
    %490 = vmatprep.subr.mxu0 0.0
    %491 = vmatpush1.msra.mxu0 0.0
    %492 = vmatprep.subr.mxu0 0.0
    %493 = vmatpush1.msra.mxu0 0.0
    %494 = vmatprep.subr.mxu0 0.0
    %495 = vmatpush1.msra.mxu0 0.0
    %496 = vmatprep.subr.mxu0 0.0
    %497 = vmatpush1.msra.mxu0 0.0
    %498 = vmatprep.subr.mxu0 0.0
    %499 = vmatpush1.msra.mxu0 0.0
    %500 = vmatprep.subr.mxu0 0.0
    %501 = vmatpush1.msra.mxu0 0.0
    %502 = vmatprep.subr.mxu0 0.0
    %503 = vmatpush1.msra.mxu0 0.0
    %504 = vmatprep.subr.mxu0 0.0
    %505 = vmatpush1.msra.mxu0 0.0
    %506 = vmatprep.subr.mxu0 0.0
    %507 = vmatpush1.msra.mxu0 0.0
    %508 = vmatprep.subr.mxu0 0.0
    %509 = vmatpush1.msra.mxu0 0.0
    %510 = vmatprep.subr.mxu0 0.0
    %511 = vmatpush1.msra.mxu0 0.0
    %512 = vmatprep.subr.mxu0 0.0
    %513 = vmatpush1.msra.mxu0 0.0
    %514 = vmatprep.subr.mxu0 0.0
    %515 = vmatpush1.msra.mxu0 0.0
    %516 = vmatprep.subr.mxu0 0.0
    %517 = vmatpush1.msra.mxu0 0.0
    %518 = vmatprep.subr.mxu0 0.0
    %519 = vmatpush1.msra.mxu0 0.0
    %520 = vmatprep.subr.mxu0 0.0
    %521 = vmatpush1.msra.mxu0 0.0
    %522 = vmatprep.subr.mxu0 0.0
    %523 = vmatpush1.msra.mxu0 0.0
    %524 = vmatprep.subr.mxu0 0.0
    %525 = vmatpush1.msra.mxu0 0.0
    %526 = vmatprep.subr.mxu0 0.0
    %527 = vmatpush1.msra.mxu0 0.0
    %528 = vmatprep.subr.mxu0 0.0
    %529 = vmatpush1.msra.mxu0 0.0
    %530 = vmatprep.subr.mxu0 0.0
    %531 = vmatpush1.msra.mxu0 0.0
    %532 = vmatprep.subr.mxu0 0.0
    %533 = vmatpush1.msra.mxu0 0.0
    %534 = vmatprep.subr.mxu0 0.0
    %535 = vmatpush1.msra.mxu0 0.0
    %536 = vmatprep.subr.mxu0 0.0
    %537 = vmatpush1.msra.mxu0 0.0
    %538 = vmatprep.subr.mxu0 0.0
    %539 = vmatpush1.msra.mxu0 0.0
    %540 = vmatprep.subr.mxu0 0.0
    %541 = vmatpush1.msra.mxu0 0.0
    %542 = vmatprep.subr.mxu0 0.0
    %543 = vmatpush1.msra.mxu0 0.0
    %544 = vmatprep.subr.mxu0 0.0
    %545 = vmatpush1.msra.mxu0 0.0
    %546 = vmatprep.mubr.f32.mxu0 0.0
    %547 = vmatmul.mubr.f32.gmra.mrb[0].mxu0 %v480
    %v548 = vpop.f32.mrb[0].mxu0
    %v549 = vadd.f32 0.0, %v548
    %v550 = vpop.f32.mrb[0].mxu0
    %551 = vdwg.mxu0
    %v553 = vsel %vm456, %v478, 0
    %555 = vmatprep.subr.mxu0 0.0
    %556 = vmatpush1.msra.mxu0 %v66
    %557 = vmatprep.subr.mxu0 0.0
    %558 = vmatpush1.msra.mxu0 0.0
    %559 = vmatprep.subr.mxu0 0.0
    %560 = vmatpush1.msra.mxu0 0.0
    %561 = vmatprep.subr.mxu0 0.0
    %562 = vmatpush1.msra.mxu0 0.0
    %563 = vmatprep.subr.mxu0 0.0
    %564 = vmatpush1.msra.mxu0 0.0
    %565 = vmatprep.subr.mxu0 0.0
    %566 = vmatpush1.msra.mxu0 0.0
    %567 = vmatprep.subr.mxu0 0.0
    %568 = vmatpush1.msra.mxu0 0.0
    %569 = vmatprep.subr.mxu0 0.0
    %570 = vmatpush1.msra.mxu0 0.0
    %571 = vmatprep.subr.mxu0 0.0
    %572 = vmatpush1.msra.mxu0 0.0
    %573 = vmatprep.subr.mxu0 0.0
    %574 = vmatpush1.msra.mxu0 0.0
    %575 = vmatprep.subr.mxu0 0.0
    %576 = vmatpush1.msra.mxu0 0.0
    %577 = vmatprep.subr.mxu0 0.0
    %578 = vmatpush1.msra.mxu0 0.0
    %579 = vmatprep.subr.mxu0 0.0
    %580 = vmatpush1.msra.mxu0 0.0
    %581 = vmatprep.subr.mxu0 0.0
    %582 = vmatpush1.msra.mxu0 0.0
    %583 = vmatprep.subr.mxu0 0.0
    %584 = vmatpush1.msra.mxu0 0.0
    %585 = vmatprep.subr.mxu0 0.0
    %586 = vmatpush1.msra.mxu0 0.0
    %587 = vmatprep.subr.mxu0 0.0
    %588 = vmatpush1.msra.mxu0 0.0
    %589 = vmatprep.subr.mxu0 0.0
    %590 = vmatpush1.msra.mxu0 0.0
    %591 = vmatprep.subr.mxu0 0.0
    %592 = vmatpush1.msra.mxu0 0.0
    %593 = vmatprep.subr.mxu0 0.0
    %594 = vmatpush1.msra.mxu0 0.0
    %595 = vmatprep.subr.mxu0 0.0
    %596 = vmatpush1.msra.mxu0 0.0
    %597 = vmatprep.subr.mxu0 0.0
    %598 = vmatpush1.msra.mxu0 0.0
    %599 = vmatprep.subr.mxu0 0.0
    %600 = vmatpush1.msra.mxu0 0.0
    %601 = vmatprep.subr.mxu0 0.0
    %602 = vmatpush1.msra.mxu0 0.0
    %603 = vmatprep.subr.mxu0 0.0
    %604 = vmatpush1.msra.mxu0 0.0
    %605 = vmatprep.subr.mxu0 0.0
    %606 = vmatpush1.msra.mxu0 0.0
    %607 = vmatprep.subr.mxu0 0.0
    %608 = vmatpush1.msra.mxu0 0.0
    %609 = vmatprep.subr.mxu0 0.0
    %610 = vmatpush1.msra.mxu0 0.0
    %611 = vmatprep.subr.mxu0 0.0
    %612 = vmatpush1.msra.mxu0 0.0
    %613 = vmatprep.subr.mxu0 0.0
    %614 = vmatpush1.msra.mxu0 0.0
    %615 = vmatprep.subr.mxu0 0.0
    %616 = vmatpush1.msra.mxu0 0.0
    %617 = vmatprep.subr.mxu0 0.0
    %618 = vmatpush1.msra.mxu0 0.0
    %619 = vmatprep.mubr.f32.mxu0 0.0
    %620 = vmatmul.mubr.f32.gmra.mrb[0].mxu0 %v553
    %v621 = vpop.f32.mrb[0].mxu0
    %v622 = vadd.f32 0.0, %v621
    %v623 = vpop.f32.mrb[0].mxu0
    %624 = vdwg.mxu0
    %v625 = vlaneseq
    %v626 = vshrl.u32 %v625, 7
    %v627 = vsub.s32 0, %v626
    %v628 = vrot.slane %v120, %v627
    %629 = vmatprep.subr.mxu0 0.0
    %630 = vmatpush1.msra.mxu0 %v86
    %631 = vmatprep.subr.mxu0 0.0
    %632 = vmatpush1.msra.mxu0 %v87
    %633 = vmatprep.subr.mxu0 0.0
    %634 = vmatpush1.msra.mxu0 %v88
    %635 = vmatprep.subr.mxu0 0.0
    %636 = vmatpush1.msra.mxu0 %v89
    %637 = vmatprep.subr.mxu0 0.0
    %638 = vmatpush1.msra.mxu0 %v90
    %639 = vmatprep.subr.mxu0 0.0
    %640 = vmatpush1.msra.mxu0 %v91
    %641 = vmatprep.subr.mxu0 0.0
    %642 = vmatpush1.msra.mxu0 %v92
    %643 = vmatprep.subr.mxu0 0.0
    %644 = vmatpush1.msra.mxu0 %v93
    %645 = vmatprep.subr.mxu0 0.0
    %646 = vmatpush1.msra.mxu0 %v94
    %647 = vmatprep.subr.mxu0 0.0
    %648 = vmatpush1.msra.mxu0 %v95
    %649 = vmatprep.subr.mxu0 0.0
    %650 = vmatpush1.msra.mxu0 %v96
    %651 = vmatprep.subr.mxu0 0.0
    %652 = vmatpush1.msra.mxu0 %v97
    %653 = vmatprep.subr.mxu0 0.0
    %654 = vmatpush1.msra.mxu0 %v98
    %655 = vmatprep.subr.mxu0 0.0
    %656 = vmatpush1.msra.mxu0 %v99
    %657 = vmatprep.subr.mxu0 0.0
    %658 = vmatpush1.msra.mxu0 %v100
    %659 = vmatprep.subr.mxu0 0.0
    %660 = vmatpush1.msra.mxu0 %v101
    %661 = vmatprep.subr.mxu0 0.0
    %662 = vmatpush1.msra.mxu0 0.0
    %663 = vmatprep.subr.mxu0 0.0
    %664 = vmatpush1.msra.mxu0 0.0
    %665 = vmatprep.subr.mxu0 0.0
    %666 = vmatpush1.msra.mxu0 0.0
    %667 = vmatprep.subr.mxu0 0.0
    %668 = vmatpush1.msra.mxu0 0.0
    %669 = vmatprep.subr.mxu0 0.0
    %670 = vmatpush1.msra.mxu0 0.0
    %671 = vmatprep.subr.mxu0 0.0
    %672 = vmatpush1.msra.mxu0 0.0
    %673 = vmatprep.subr.mxu0 0.0
    %674 = vmatpush1.msra.mxu0 0.0
    %675 = vmatprep.subr.mxu0 0.0
    %676 = vmatpush1.msra.mxu0 0.0
    %677 = vmatprep.subr.mxu0 0.0
    %678 = vmatpush1.msra.mxu0 0.0
    %679 = vmatprep.subr.mxu0 0.0
    %680 = vmatpush1.msra.mxu0 0.0
    %681 = vmatprep.subr.mxu0 0.0
    %682 = vmatpush1.msra.mxu0 0.0
    %683 = vmatprep.subr.mxu0 0.0
    %684 = vmatpush1.msra.mxu0 0.0
    %685 = vmatprep.subr.mxu0 0.0
    %686 = vmatpush1.msra.mxu0 0.0
    %687 = vmatprep.subr.mxu0 0.0
    %688 = vmatpush1.msra.mxu0 0.0
    %689 = vmatprep.subr.mxu0 0.0
    %690 = vmatpush1.msra.mxu0 0.0
    %691 = vmatprep.subr.mxu0 0.0
    %692 = vmatpush1.msra.mxu0 0.0
    %693 = vmatprep.mubr.f32.mxu0 0.0
    %694 = vmatmul.mubr.f32.gmra.mrb[0].mxu0 %v549
    %v695 = vpop.f32.mrb[0].mxu0
    %v696 = vadd.f32 %v628, %v695
    %v697 = vpop.f32.mrb[0].mxu0
    %698 = vmatprep.mubr.f32.mxu0 0.0
    %699 = vmatmul.mubr.f32.gmra.mrb[0].mxu0 %v622
    %v700 = vpop.f32.mrb[0].mxu0
    %v701 = vadd.f32 %v628, %v700
    %v702 = vpop.f32.mrb[0].mxu0
    %703 = vdwg.mxu0
    %v704 = vtanh.pop %v696
    %v705 = vtanh.pop %v701
    %v706 = vlaneseq
    %v707 = vshrl.u32 %v706, 7
    %v708 = vsub.s32 0, %v707
    %v709 = vrot.slane %v122, %v708
    %v710 = vmul.f32 %v704, %v709
    %v711 = vmul.f32 %v705, %v709
    %712 = vadd.xlane.f32.xlu0 %v710
    %v713 = vpop.xlane.xlu0 %712
    %714 = vadd.xlane.f32.xlu0 %v711
    %v715 = vpop.xlane.xlu0 %714
    %v716 = vtanh.pop %v274
    %v717 = vtanh.pop %v279
    %v718 = vlaneseq
    %v719 = vshrl.u32 %v718, 7
    %v720 = vsub.s32 0, %v719
    %v721 = vrot.slane %v123, %v720
    %v722 = vmul.f32 %v716, %v721
    %v723 = vmul.f32 %v717, %v721
    %724 = vadd.xlane.f32.xlu0 %v722
    %v725 = vpop.xlane.xlu0 %724
    %726 = vadd.xlane.f32.xlu0 %v723
    %v727 = vpop.xlane.xlu0 %726
    %v728 = vadd.f32 %v713, %v725
    %v729 = vadd.f32 %v715, %v727
    %v732 = vlaneseq
    %v733 = vand.u32 %v732, 127
    %v734 = vlaneseq
    %v735 = vshrl.u32 %v734, 7
    %v736 = vsub.s32 %v733, %v735
    %v737 = vrot.slane %v728, %v736
    %v738 = vlaneseq
    %v739 = vshrl.u32 %v738, 7
    %v740 = vsub.s32 %v733, %v739
    %v741 = vrot.slane %v729, %v740
    %vm742 = vcmask 1041409
    %v743 = vsel %vm742, %v741, %v737
    %v745 = vsel %vm456, %v743, 0.0
    %v746 = vld [vmem:[%s3] sm:$0x3]
    %v747 = vadd.f32 %v745, %v746
    %748 = vst [vmem:[#allocation8] sm:$0x3] %v747
    // Predicated region
    $region38: #{tpu_custom_call.1} parent=1 // pred_check
      _
    $region39: #{tpu_custom_call.1} parent=1 // pred_check_branch
      %750 = sbr.rel (0) target = $region41
    $region40: #{tpu_custom_call.1} parent=1 // pred_region
      %s752 = ssub.s32 32, 32
      %753 = vsyncadd [#allocation4], %s752
      %s755 = sshll.u32 [#allocation8], 4
      %s756 = int_to_ptr.vmem [resolvable:$true] %s755
      %758 = dma.vmem_to_hbm [thread:$0]  %s756, 32, %s6, [#allocation4]
    $region41: #{tpu_custom_call.1} parent=1 // pred_fallthru
      _
    // Predicated region
    $region42: #{tpu_custom_call.1} parent=1 // pred_check
      _
    $region43: #{tpu_custom_call.1} parent=1 // pred_check_branch
      %760 = sbr.rel (0) target = $region45
    $region44: #{tpu_custom_call.1} parent=1 // pred_region
      %761 = dma.done [#allocation4], 32
    $region45: #{tpu_custom_call.1} parent=1 // pred_fallthru
      _
    %762 = vsyncpa [#allocation3], 1
    %763 = vsyncpa [#allocation6], 1
    %764 = vsyncpa [#allocation4], 1

</llo_original>
